<compile_context>
chip_gen: v5e
topology: v5e:2x2
jax: 0.10.0
libtpu: 0.0.40
codegen_flags: <defaults>
</compile_context>

<pallas_src>
import numpy as np
import jax
import jax.numpy as jnp
from jax import lax
from jax.experimental import pallas as pl
from jax.experimental.pallas import tpu as pltpu


# ------------------------------ Pallas kernel -------------------------------

def _conv_relu_pool_kernel(p_ref, w_ref, o_ref):
    # p_ref: [4, TP, Kp]   bf16 -- 4 pool-phase patch matrices for this row tile
    # w_ref: [Kp, COUTP]   bf16 -- conv weights + bias row (resident tile)
    # o_ref: [TP, COUTP]   f32  -- pooled, ReLU'd output rows (lane-dense)
    tp = o_ref.shape[0]
    kp = p_ref.shape[2]
    # Leading-axis collapse is layout-free (tp is a multiple of the bf16
    # sublane tile), so all four phases go through the MXU in ONE matmul.
    p = p_ref[...].reshape(4 * tp, kp)
    acc = jnp.dot(p, w_ref[...], preferred_element_type=jnp.float32)
    # Interleaved maxes: at most two (TP, COUTP) f32 accumulators live.
    m = jnp.maximum(acc[0:tp], acc[tp:2 * tp])
    m = jnp.maximum(m, acc[2 * tp:3 * tp])
    m = jnp.maximum(m, acc[3 * tp:4 * tp])
    # Bias already rode in via the 1.0 bias-tap column; just ReLU and store.
    o_ref[...] = jnp.maximum(m, 0.0)


# ------------------------------ Pallas wrapper -------------------------------

def _choose_tile(mp, max_tp=512):
    """Row tile (multiple of 16 for bf16 sublanes) and padded row count such
    that the grid has an even number (>=2) of steps -> both v7x TCs get work."""
    n_steps = max(2, -(-mp // max_tp))
    if n_steps % 2:
        n_steps += 1
    tp = -(-mp // n_steps)
    tp = ((tp + 15) // 16) * 16
    return tp, tp * n_steps


def pallas_conv_relu_pool(patches4, w_gemm, mp, cout):
    """patches4: [4, MP_pad, Kp] bf16 (bias tap + lane padding already folded in)
    w_gemm:   [Kp, COUTP] bf16 (bias row + Cout padding already folded in)
    returns relu(maxpool(conv + bias)) rows: [MP, Cout] f32."""
    _, mp_pad, k_pad = patches4.shape
    cout_pad = w_gemm.shape[1]
    tp = mp_pad // (mp_pad // _choose_tile(mp)[0]) if False else None  # unused
    tp, mp_pad_check = _choose_tile(mp)
    assert mp_pad == mp_pad_check

    out = pl.pallas_call(
        _conv_relu_pool_kernel,
        out_shape=jax.ShapeDtypeStruct((mp_pad, cout_pad), jnp.float32),
        grid=(mp_pad // tp,),
        in_specs=[
            pl.BlockSpec((4, tp, k_pad), lambda i: (0, i, 0)),
            pl.BlockSpec((k_pad, cout_pad), lambda i: (0, 0)),  # resident weights
        ],
        out_specs=pl.BlockSpec((tp, cout_pad), lambda i: (i, 0)),
        compiler_params=pltpu.CompilerParams(
            dimension_semantics=("parallel",)),  # >=2 steps -> v7x megacore
    )(patches4, w_gemm)
    # Padded tail rows (mp..mp_pad) and columns (cout..cout_pad) are inert
    # zeros / garbage -- the slice below is load-bearing, do not remove.
    return out[:mp, :cout]


# --------------------------------- Glue -------------------------------------

def _pooled_patches_bf16(x_nhwc_bf16, ksize, hp, wp, k_pad):
    """4 im2col patch matrices (one per 2x2-pool phase), bf16, with the
    contraction dim padded to k_pad: a 1.0 'bias tap' column at index
    ksize*ksize*Cin followed by zeros.  Group g = 2*dy + dx holds the conv
    input patch for output position (2*h + dy, 2*w + dx)."""
    n, _, _, c = x_nhwc_bf16.shape
    k = ksize * ksize * c
    ones = jnp.ones((n, hp, wp, 1), dtype=jnp.bfloat16)
    zeros = jnp.zeros((n, hp, wp, k_pad - k - 1), dtype=jnp.bfloat16)
    groups = []
    for dy in range(2):
        for dx in range(2):
            cols = []
            for ki in range(ksize):
                for kj in range(ksize):
                    r0 = dy + ki
                    c0 = dx + kj
                    patch = x_nhwc_bf16[:, r0:r0 + 2 * (hp - 1) + 1:2,
                                        c0:c0 + 2 * (wp - 1) + 1:2, :]
                    cols.append(patch)                     # [n, hp, wp, c]
            cols.append(ones)    # bias tap (multiplies the bias row of W)
            cols.append(zeros)   # lane padding to k_pad (inert)
            p = jnp.concatenate(cols, axis=-1)             # [n, hp, wp, k_pad]
            groups.append(p.reshape(n * hp * wp, k_pad))
    return jnp.stack(groups, axis=0)                       # [4, MP, k_pad]


def _conv_w_bias_to_gemm_bf16(w_oihw, bias, k_pad, cout_pad):
    """[Cout, Cin, kh, kw] + [Cout] -> [k_pad, cout_pad] bf16 with (ki, kj, c)
    row order (matches the patch column order), a bias row at index k, zero
    padding elsewhere."""
    cout, cin, kh, kw = w_oihw.shape
    k = kh * kw * cin
    wg = jnp.transpose(w_oihw, (2, 3, 1, 0)).reshape(k, cout).astype(jnp.float32)
    wg = jnp.concatenate(
        [wg, bias.reshape(1, cout).astype(jnp.float32),
         jnp.zeros((k_pad - k - 1, cout), jnp.float32)], axis=0)     # [k_pad, cout]
    wg = jnp.pad(wg, ((0, 0), (0, cout_pad - cout)))                 # [k_pad, cout_pad]
    return wg.astype(jnp.bfloat16)


def lenet_pool1_forward(x_nchw, weight, bias):
    """Conv2d(k=5, stride=1, pad=0, bias) -> ReLU -> MaxPool2d(2, 2)."""
    # Cast to bf16 BEFORE the 25x im2col expansion (halves glue HBM traffic).
    x = jnp.transpose(x_nchw, (0, 2, 3, 1)).astype(jnp.bfloat16)     # NHWC bf16
    n, h, w, _ = x.shape
    cout, cin, kh, kw = weight.shape
    ho, wo = h - kh + 1, w - kw + 1
    hp, wp = ho // 2, wo // 2                 # MaxPool2d(2,2) floors odd sizes

    k = kh * kw * cin
    k_pad = ((k + 1 + 127) // 128) * 128      # +1 for the bias tap column
    cout_pad = ((cout + 127) // 128) * 128    # lane-dense output stores

    patches4 = _pooled_patches_bf16(x, kh, hp, wp, k_pad)            # [4, MP, Kp]
    w_gemm = _conv_w_bias_to_gemm_bf16(weight, bias, k_pad, cout_pad)

    mp = n * hp * wp
    _, mp_pad = _choose_tile(mp)
    if mp_pad != mp:
        patches4 = jnp.pad(patches4, ((0, 0), (0, mp_pad - mp), (0, 0)))

    out_mc = pallas_conv_relu_pool(patches4, w_gemm, mp, cout)       # [MP, Cout]
    out = out_mc.reshape(n, hp, wp, cout)
    return jnp.transpose(out, (0, 3, 1, 2))                          # NCHW


# ----------------------------- pure-JAX reference ----------------------------

def reference_forward(x, weight, bias):
    y = lax.conv_general_dilated(
        x, weight, (1, 1), "VALID",
        dimension_numbers=("NCHW", "OIHW", "NCHW"))
    y = y + bias.reshape(1, -1, 1, 1)
    y = jax.nn.relu(y)
    y = lax.reduce_window(y, -jnp.inf, lax.max,
                          (1, 1, 2, 2), (1, 1, 2, 2), "VALID")
    return y


# ----------------------------------- main ------------------------------------

if __name__ == "__main__":
    key = jax.random.PRNGKey(0)
    k_x, k_w, k_b = jax.random.split(key, 3)

    batch, n_channels, spatial = 2, 4, 16
    out_channels, ksize = 8, 5

    x = jax.random.normal(k_x, (batch, n_channels, spatial, spatial),
                          dtype=jnp.float32)
    weight = (0.1 * jax.random.normal(
        k_w, (out_channels, n_channels, ksize, ksize))).astype(jnp.float32)
    bias = (0.1 * jax.random.normal(k_b, (out_channels,))).astype(jnp.float32)

    out = lenet_pool1_forward(x, weight, bias)
    out = jax.block_until_ready(out)

    ref = jax.block_until_ready(reference_forward(x, weight, bias))
    np.testing.assert_allclose(np.asarray(out), np.asarray(ref),
                               rtol=5e-2, atol=5e-2)

    print("KERNEL_OK")
</pallas_src>

<mosaic_0001>
module attributes {stable_mosaic.version = 11 : i64} {
  func.func @_conv_relu_pool_kernel(%arg0: i32, %arg1: memref<4x48x128xbf16, #tpu.memory_space<vmem>>, %arg2: memref<128x128xbf16, #tpu.memory_space<vmem>>, %arg3: memref<48x128xf32, #tpu.memory_space<vmem>>) attributes {dimension_semantics = [#tpu.dimension_semantics<parallel>], iteration_bounds = array<i64: 2>, scalar_prefetch = 0 : i64, scratch_operands = 0 : i64, tpu.core_type = #tpu.core_type<tc>, window_params = [{transform_indices = @transform_0, window_bounds = array<i64: 4, 48, 128>}, {pipeline_mode = #tpu.pipeline_mode<synchronous>, transform_indices = @transform_1, window_bounds = array<i64: 128, 128>}, {transform_indices = @transform_2, window_bounds = array<i64: 48, 128>}]} {
    %c0 = arith.constant 0 : index
    %c0_0 = arith.constant 0 : index
    %c0_1 = arith.constant 0 : index
    %0 = vector.load %arg1[%c0, %c0_0, %c0_1] : memref<4x48x128xbf16, #tpu.memory_space<vmem>>, vector<4x48x128xbf16>
    %1 = vector.shape_cast %0 : vector<4x48x128xbf16> to vector<192x128xbf16>
    %c0_2 = arith.constant 0 : index
    %c0_3 = arith.constant 0 : index
    %2 = vector.load %arg2[%c0_2, %c0_3] : memref<128x128xbf16, #tpu.memory_space<vmem>>, vector<128x128xbf16>
    %cst = arith.constant dense<0.000000e+00> : vector<192x128xf32>
    %3 = tpu.matmul %1, %2, %cst {dimension_numbers = #tpu.dot_dimension_numbers<[1], [0], [0], [1], [0, 0, 1, 1], [], []>} : vector<192x128xbf16>, vector<128x128xbf16>, vector<192x128xf32> -> vector<192x128xf32>
    %4 = vector.extract_strided_slice %3 {offsets = [0, 0], sizes = [48, 128], strides = [1, 1]} : vector<192x128xf32> to vector<48x128xf32>
    %5 = vector.extract_strided_slice %3 {offsets = [48, 0], sizes = [48, 128], strides = [1, 1]} : vector<192x128xf32> to vector<48x128xf32>
    %6 = arith.maximumf %4, %5 : vector<48x128xf32>
    %7 = vector.extract_strided_slice %3 {offsets = [96, 0], sizes = [48, 128], strides = [1, 1]} : vector<192x128xf32> to vector<48x128xf32>
    %8 = arith.maximumf %6, %7 : vector<48x128xf32>
    %9 = vector.extract_strided_slice %3 {offsets = [144, 0], sizes = [48, 128], strides = [1, 1]} : vector<192x128xf32> to vector<48x128xf32>
    %10 = arith.maximumf %8, %9 : vector<48x128xf32>
    %cst_4 = arith.constant 0.000000e+00 : f32
    %11 = vector.broadcast %cst_4 : f32 to vector<48x128xf32>
    %12 = arith.maximumf %10, %11 : vector<48x128xf32>
    %c0_5 = arith.constant 0 : index
    %c0_6 = arith.constant 0 : index
    %13 = vector.load %arg3[%c0_5, %c0_6] : memref<48x128xf32, #tpu.memory_space<vmem>>, vector<48x128xf32>
    tpu.vector_store %arg3[%c0_5, %c0_6], %12 {strides = array<i32>} : memref<48x128xf32, #tpu.memory_space<vmem>>, vector<48x128xf32>,
    return
  }
  func.func @transform_0(%arg0: i32) -> (i32, i32, i32) {
    %c0_i32 = arith.constant 0 : i32
    %c0_i32_0 = arith.constant 0 : i32
    %c0_i32_1 = arith.constant 0 : i32
    return %c0_i32, %arg0, %c0_i32_0 : i32, i32, i32
  }
  func.func @transform_1(%arg0: i32) -> (i32, i32) {
    %c0_i32 = arith.constant 0 : i32
    %c0_i32_0 = arith.constant 0 : i32
    %c0_i32_1 = arith.constant 0 : i32
    return %c0_i32, %c0_i32_0 : i32, i32
  }
  func.func @transform_2(%arg0: i32) -> (i32, i32) {
    %c0_i32 = arith.constant 0 : i32
    %c0_i32_0 = arith.constant 0 : i32
    return %arg0, %c0_i32 : i32, i32
  }
}

</mosaic_0001>

<llo_original>
// kernel: tpu_custom_call.1
$region0: #{tpu_custom_call.1}
  #allocation0 [shape = 'u32[]', space=smem, size = 0x4, offset = 0x4, fixed_abs, tag = 'smem constant byte address 0x4 - core index']
  #allocation1 [shape = 'u32[72,128]{1,0:T(1,128)}', space=vmem, size = 0x9000, scoped, tag = 'internal scratch']
  #allocation8 [shape = 's32[]', space=sflag, size = 0x4, offset = 0, fixed_abs, tag = 'sflag constant byte address 0x0 - dummy sync flag']
  %s0 = inlined_call_operand.hbm [shape: bf16[4,96,128], index: 0, kind: input, shape index: {}]
  %s1 = inlined_call_operand.hbm [shape: bf16[128,128], index: 1, kind: input, shape index: {}]
  %s2 = inlined_call_operand.hbm [shape: f32[96,128], index: 2, kind: output, shape index: {}]
  %s3 = sld [smem:[#allocation0]]
  $region49: #{tpu_custom_call.1} parent=0
    _
  %s5 = ssub.s32 1, %s3
  %s6 = scalar_select 0, %s5, %s3
  $region1: #{tpu_custom_call.1} parent=0
    #allocation2 [shape = 'u8[98304]{0}', space=vmem, size = 0x18000, scoped, tag = 'input window, operand 0']
    #allocation3 [shape = 's32[2]{0}', space=sflag, size = 0x8, scoped, tag = 'scoped memory for tpu_custom_call.1']
    #allocation4 [shape = 's32[2]{0}', space=sflag, size = 0x8, scoped, tag = 'scoped memory for tpu_custom_call.1']
    #allocation5 [shape = 'u8[32768]{0}', space=vmem, size = 0x8000, scoped, tag = 'input window, operand 1, single buffered']
    #allocation6 [shape = 's32[1]{0}', space=sflag, size = 0x4, scoped, tag = 'scoped memory for tpu_custom_call.1']
    #allocation7 [shape = 'u8[49152]{0}', space=vmem, size = 0xc000, scoped, tag = 'output window, operand 0']
    %7 = vsyncpa [#allocation3], 0
    %s8 = scalar_lea.sflag [#allocation3], 1
    %9 = vsyncpa %s8, 0
    %10 = vsyncpa [#allocation6], 0
    %11 = vsyncpa [#allocation4], 0
    %s12 = scalar_lea.sflag [#allocation4], 1
    %13 = vsyncpa %s12, 0
    loop: start=0, step=1, limit=4
    $region2: #{tpu_custom_call.1} parent=1 // loop_pre_header
      _
    $region3: #{tpu_custom_call.1} parent=1 // loop_header
      %s15 = sphi 0, %s19
      %p16 = scmp.ge.s32.totalorder %s15, 4
      %s25 = sphi 0, %s27
      %s28 = sphi 0, %s25
      %s29 = sphi 0, %s28
      %s45 = sphi 0, %s29
      %s49 = sphi 0, %s49
      %s51 = sphi 0, %s49
      %s52 = sphi 0, %s51
      %s66 = sphi 0, %s52
      %s72 = sphi 0, %s74
      %s75 = sphi 0, %s72
      %s76 = sphi 0, %s75
      %s92 = sphi 0, %s76
    $region4: #{tpu_custom_call.1} parent=1 // loop_header_branch
      %18 = sbr.rel (%p16) target = $region8
    $region5: #{tpu_custom_call.1} parent=1 // loop_body
      %s20 = ssub.s32 %s15, 1
      %s21 = ssub.s32 %s15, 2
      %s22 = sadd.s32 %s15, 1
      %s23 = ssub.s32 %s15, %s22
      %p24 = scmp.eq.s32.totalorder %s23, 0
      %s26 = sadd.s32 %s25, 1
      %s27 = scalar_select %p24, %s25, %s26
      %p30 = pneg %p24
      %p31 = scmp.eq.s32.totalorder %s15, 1
      %p32 = por %p30, %p31
      %p33 = scmp.ne.s32.totalorder %s25, %s28
      %p34 = scmp.eq.s32.totalorder %s15, 0
      %p35 = por %p33, %p34
      %p36 = scmp.ne.s32.totalorder %s25, %s28
      %p37 = scmp.eq.s32.totalorder %s20, 1
      %p38 = por %p36, %p37
      %p39 = scmp.ne.s32.totalorder %s28, %s29
      %p40 = scmp.eq.s32.totalorder %s20, 0
      %p41 = por %p39, %p40
      %p42 = scmp.ne.s32.totalorder %s28, %s29
      %p43 = scmp.eq.s32.totalorder %s21, 1
      %p44 = por %p42, %p43
      %p46 = scmp.ne.s32.totalorder %s29, %s45
      %p47 = scmp.eq.s32.totalorder %s21, 0
      %p48 = por %p46, %p47
      %s50 = sadd.s32 %s49, 1
      %p53 = scmp.eq.s32.totalorder %s15, 1
      %p54 = scmp.ne.s32.totalorder %s49, %s51
      %p55 = scmp.eq.s32.totalorder %s15, 0
      %p56 = por %p54, %p55
      %p57 = scmp.ne.s32.totalorder %s49, %s51
      %p58 = scmp.eq.s32.totalorder %s20, 1
      %p59 = por %p57, %p58
      %p60 = scmp.ne.s32.totalorder %s51, %s52
      %p61 = scmp.eq.s32.totalorder %s20, 0
      %p62 = por %p60, %p61
      %p63 = scmp.ne.s32.totalorder %s51, %s52
      %p64 = scmp.eq.s32.totalorder %s21, 1
      %p65 = por %p63, %p64
      %p67 = scmp.ne.s32.totalorder %s52, %s66
      %p68 = scmp.eq.s32.totalorder %s21, 0
      %p69 = por %p67, %p68
      %s70 = ssub.s32 %s15, %s22
      %p71 = scmp.eq.s32.totalorder %s70, 0
      %s73 = sadd.s32 %s72, 1
      %s74 = scalar_select %p71, %s72, %s73
      %p77 = pneg %p71
      %p78 = scmp.eq.s32.totalorder %s15, 1
      %p79 = por %p77, %p78
      %p80 = scmp.ne.s32.totalorder %s72, %s75
      %p81 = scmp.eq.s32.totalorder %s15, 0
      %p82 = por %p80, %p81
      %p83 = scmp.ne.s32.totalorder %s72, %s75
      %p84 = scmp.eq.s32.totalorder %s20, 1
      %p85 = por %p83, %p84
      %p86 = scmp.ne.s32.totalorder %s75, %s76
      %p87 = scmp.eq.s32.totalorder %s20, 0
      %p88 = por %p86, %p87
      %p89 = scmp.ne.s32.totalorder %s75, %s76
      %p90 = scmp.eq.s32.totalorder %s21, 1
      %p91 = por %p89, %p90
      %p93 = scmp.ne.s32.totalorder %s76, %s92
      %p94 = scmp.eq.s32.totalorder %s21, 0
      %p95 = por %p93, %p94
      %p96 = scmp.le.s32.totalorder 1, %s15
      %p97 = scmp.lt.s32.totalorder %s15, 3
      %p98 = pnand %p96, %p97
      %p99 = pneg %p98
      // Predicated region
      $region9: #{tpu_custom_call.1} parent=5 // pred_check
        _
      $region10: #{tpu_custom_call.1} parent=5 // pred_check_branch
        %101 = sbr.rel (%p98) target = $region12
      $region11: #{tpu_custom_call.1} parent=5 // pred_region
        %s102 = ssub.s32 %s15, 1
        // Predicated region
        $region13: #{tpu_custom_call.1} parent=11 // pred_check
          %p103 = pneg %p62
        $region14: #{tpu_custom_call.1} parent=11 // pred_check_branch
          %105 = sbr.rel (%p103) target = $region16
        $region15: #{tpu_custom_call.1} parent=11 // pred_region
          %107 = vsyncadd [#allocation6], 0
          %s108 = sshll.u32 %s1, 4
          %s109 = int_to_ptr.hbm [resolvable:$true] %s108
          %s110 = sshll.u32 [#allocation5], 4
          %s111 = int_to_ptr.vmem [resolvable:$true] %s110
          %116 = dma.hbm_to_vmem [thread:$0]  %s109, 1024, %s111, [#allocation6], 64, 64, 4
        $region16: #{tpu_custom_call.1} parent=11 // pred_fallthru
          _
      $region12: #{tpu_custom_call.1} parent=5 // pred_fallthru
        _
      %p117 = scmp.lt.s32.totalorder %s15, 2
      // Predicated region
      $region17: #{tpu_custom_call.1} parent=5 // pred_check
        %p118 = pneg %p117
      $region18: #{tpu_custom_call.1} parent=5 // pred_check_branch
        %120 = sbr.rel (%p118) target = $region20
      $region19: #{tpu_custom_call.1} parent=5 // pred_region
        // Predicated region
        $region21: #{tpu_custom_call.1} parent=19 // pred_check
          %p121 = pneg %p35
        $region22: #{tpu_custom_call.1} parent=19 // pred_check_branch
          %123 = sbr.rel (%p121) target = $region24
        $region23: #{tpu_custom_call.1} parent=19 // pred_region
          #allocation9 [shape = 'u32[6]{0}', space=smem, size = 0x18, scoped, tag = 'DMA stride descriptor']
          %s124 = sand.u32 %s25, 1
          %s125 = scalar_lea.sflag [#allocation3], %s124
          %s126 = sand.u32 %s25, 1
          %s127 = smul.addr %s126, 96
          %s128 = scalar_lea.vmem [#allocation2], %s127
          %s129 = smul.u32 6, %s15
          %131 = vsyncadd %s125, 0
          %s132 = smul.addr %s129, 4
          %s133 = scalar_lea.hbm %s0, %s132
          %s135 = sshll.u32 1, 14
          %s136 = sxor.u32 4294967295, %s135
          %s138 = sld [smem:[#allocation0]]
          %s139 = sadd.s32 2, %s138
          %s141 = sshll.u32 7, 26
          %s142 = sxor.u32 4294967295, %s141
          %s143 = sand.u32 0, %s142
          %s144 = sshll.u32 %s139, 26
          %s145 = sor.u32 %s143, %s144
          %s146 = sshll.u32 %s133, 4
          %s147 = int_to_ptr.hbm [resolvable:$true] %s146
          %s148 = sshll.u32 %s128, 4
          %s149 = int_to_ptr.vmem [resolvable:$true] %s148
          %155 = sst [smem:[#allocation9]] 768
          %s156 = scalar_lea.smem [#allocation9], 1
          %157 = sst [smem:[%s156]] 384
          %s158 = scalar_lea.smem [#allocation9], 2
          %159 = sst [smem:[%s158]] 6
          %s160 = scalar_lea.smem [#allocation9], 3
          %161 = sst [smem:[%s160]] 64
          %s162 = scalar_lea.smem [#allocation9], 4
          %163 = sst [smem:[%s162]] 64
          %s164 = scalar_lea.smem [#allocation9], 5
          %165 = sst [smem:[%s164]] 4
          %167 = dma.general %s147, 1536, %s149, %s125, [#allocation8], [#allocation9], %s145, 0
        $region24: #{tpu_custom_call.1} parent=19 // pred_fallthru
          _
      $region20: #{tpu_custom_call.1} parent=5 // pred_fallthru
        _
      %p168 = scmp.le.s32.totalorder 1, %s15
      %p169 = scmp.lt.s32.totalorder %s15, 3
      %p170 = pnand %p168, %p169
      %p171 = pneg %p170
      // Predicated region
      $region25: #{tpu_custom_call.1} parent=5 // pred_check
        _
      $region26: #{tpu_custom_call.1} parent=5 // pred_check_branch
        %173 = sbr.rel (%p170) target = $region28
      $region27: #{tpu_custom_call.1} parent=5 // pred_region
        %s174 = ssub.s32 %s15, 1
        %s175 = sand.u32 %s28, 1
        %s176 = scalar_lea.sflag [#allocation3], %s175
        %s177 = sand.u32 %s28, 1
        %s178 = smul.addr %s177, 96
        %s179 = scalar_lea.vmem [#allocation2], %s178
        // Predicated region
        $region29: #{tpu_custom_call.1} parent=27 // pred_check
          %p180 = pneg %p41
        $region30: #{tpu_custom_call.1} parent=27 // pred_check_branch
          %182 = sbr.rel (%p180) target = $region32
        $region31: #{tpu_custom_call.1} parent=27 // pred_region
          %184 = dma.done %s176, 1536
        $region32: #{tpu_custom_call.1} parent=27 // pred_fallthru
          _
        // Predicated region
        $region33: #{tpu_custom_call.1} parent=27 // pred_check
          %p185 = pneg %p62
        $region34: #{tpu_custom_call.1} parent=27 // pred_check_branch
          %187 = sbr.rel (%p185) target = $region36
        $region35: #{tpu_custom_call.1} parent=27 // pred_region
          %189 = dma.done [#allocation6], 1024
        $region36: #{tpu_custom_call.1} parent=27 // pred_fallthru
          _
        %s190 = sand.u32 %s28, 1
        %s191 = scalar_lea.sflag [#allocation3], %s190
        %s192 = sand.u32 %s28, 1
        %s193 = smul.addr %s192, 96
        %s194 = scalar_lea.vmem [#allocation2], %s193
        %p195 = pneg %p41
        %p196 = pneg %p38
        %p197 = pneg %p62
        %p198 = pneg %p59
        %p199 = pneg %p88
        %p200 = pneg %p85
        %s201 = sand.u32 %s75, 1
        %s202 = scalar_lea.sflag [#allocation4], %s201
        %s203 = sand.u32 %s75, 1
        %s204 = smul.addr %s203, 48
        %s205 = scalar_lea.vmem [#allocation7], %s204
        %s206 = smul.u32 6, %s20
        %s207 = smul.u32 6, %s20
        %v208 = vld [vmem:[%s179] sm:$0xf]
        %v209 = vld [vmem:[%s179 + $0x4] sm:$0xf]
        %v210 = vld [vmem:[%s179 + $0x8] sm:$0xf]
        %v211 = vld [vmem:[%s179 + $0xc] sm:$0xf]
        %v212 = vld [vmem:[%s179 + $0x10] sm:$0xf]
        %v213 = vld [vmem:[%s179 + $0x14] sm:$0xf]
        %v214 = vld [vmem:[%s179 + $0x18] sm:$0xf]
        %v215 = vld [vmem:[%s179 + $0x1c] sm:$0xf]
        %v216 = vld [vmem:[%s179 + $0x20] sm:$0xf]
        %v217 = vld [vmem:[%s179 + $0x24] sm:$0xf]
        %v218 = vld [vmem:[%s179 + $0x28] sm:$0xf]
        %v219 = vld [vmem:[%s179 + $0x2c] sm:$0xf]
        %v220 = vld [vmem:[%s179 + $0x30] sm:$0xf]
        %v221 = vld [vmem:[%s179 + $0x34] sm:$0xf]
        %v222 = vld [vmem:[%s179 + $0x38] sm:$0xf]
        %v223 = vld [vmem:[%s179 + $0x3c] sm:$0xf]
        %v224 = vld [vmem:[%s179 + $0x40] sm:$0xf]
        %v225 = vld [vmem:[%s179 + $0x44] sm:$0xf]
        %v226 = vld [vmem:[%s179 + $0x48] sm:$0xf]
        %v227 = vld [vmem:[%s179 + $0x4c] sm:$0xf]
        %v228 = vld [vmem:[%s179 + $0x50] sm:$0xf]
        %v229 = vld [vmem:[%s179 + $0x54] sm:$0xf]
        %v230 = vld [vmem:[%s179 + $0x58] sm:$0xf]
        %v231 = vld [vmem:[%s179 + $0x5c] sm:$0xf]
        %v232 = vld [vmem:[#allocation5] sm:$0xf]
        %v233 = vld [vmem:[#allocation5 + $0x4] sm:$0xf]
        %v234 = vld [vmem:[#allocation5 + $0x8] sm:$0xf]
        %v235 = vld [vmem:[#allocation5 + $0xc] sm:$0xf]
        %v236 = vld [vmem:[#allocation5 + $0x10] sm:$0xf]
        %v237 = vld [vmem:[#allocation5 + $0x14] sm:$0xf]
        %v238 = vld [vmem:[#allocation5 + $0x18] sm:$0xf]
        %v239 = vld [vmem:[#allocation5 + $0x1c] sm:$0xf]
        %v240 = vld [vmem:[#allocation5 + $0x20] sm:$0xf]
        %v241 = vld [vmem:[#allocation5 + $0x24] sm:$0xf]
        %v242 = vld [vmem:[#allocation5 + $0x28] sm:$0xf]
        %v243 = vld [vmem:[#allocation5 + $0x2c] sm:$0xf]
        %v244 = vld [vmem:[#allocation5 + $0x30] sm:$0xf]
        %v245 = vld [vmem:[#allocation5 + $0x34] sm:$0xf]
        %v246 = vld [vmem:[#allocation5 + $0x38] sm:$0xf]
        %v247 = vld [vmem:[#allocation5 + $0x3c] sm:$0xf]
        %v272 = vunpack.c.l.b16 %v208
        %v273 = vunpack.c.l.b16 %v209
        %v274 = vunpack.c.l.b16 %v210
        %v275 = vunpack.c.l.b16 %v211
        %v276 = vunpack.c.l.b16 %v212
        %v277 = vunpack.c.l.b16 %v213
        %v278 = vunpack.c.l.b16 %v214
        %v279 = vunpack.c.l.b16 %v215
        %v280 = vunpack.c.l.b16 %v216
        %v281 = vunpack.c.l.b16 %v217
        %v282 = vunpack.c.l.b16 %v218
        %v283 = vunpack.c.l.b16 %v219
        %v284 = vunpack.c.l.b16 %v220
        %v285 = vunpack.c.l.b16 %v221
        %v286 = vunpack.c.l.b16 %v222
        %v287 = vunpack.c.l.b16 %v223
        %v288 = vunpack.c.l.b16 %v224
        %v289 = vunpack.c.l.b16 %v225
        %v290 = vunpack.c.l.b16 %v226
        %v291 = vunpack.c.l.b16 %v227
        %v292 = vunpack.c.l.b16 %v228
        %v293 = vunpack.c.l.b16 %v229
        %v294 = vunpack.c.l.b16 %v230
        %v295 = vunpack.c.l.b16 %v231
        %v296 = vpack.c.b16 %v273, %v272
        %v297 = vpack.c.b16 %v275, %v274
        %v298 = vpack.c.b16 %v277, %v276
        %v299 = vpack.c.b16 %v279, %v278
        %v300 = vpack.c.b16 %v281, %v280
        %v301 = vpack.c.b16 %v283, %v282
        %v302 = vpack.c.b16 %v285, %v284
        %v303 = vpack.c.b16 %v287, %v286
        %v304 = vpack.c.b16 %v289, %v288
        %v305 = vpack.c.b16 %v291, %v290
        %v306 = vpack.c.b16 %v293, %v292
        %v307 = vpack.c.b16 %v295, %v294
        %v336 = vunpack.c.l.b16 %v232
        %v337 = vunpack.c.l.b16 %v233
        %v338 = vunpack.c.l.b16 %v234
        %v339 = vunpack.c.l.b16 %v235
        %v340 = vunpack.c.l.b16 %v236
        %v341 = vunpack.c.l.b16 %v237
        %v342 = vunpack.c.l.b16 %v238
        %v343 = vunpack.c.l.b16 %v239
        %v344 = vunpack.c.l.b16 %v240
        %v345 = vunpack.c.l.b16 %v241
        %v346 = vunpack.c.l.b16 %v242
        %v347 = vunpack.c.l.b16 %v243
        %v348 = vunpack.c.l.b16 %v244
        %v349 = vunpack.c.l.b16 %v245
        %v350 = vunpack.c.l.b16 %v246
        %v351 = vunpack.c.l.b16 %v247
        %v352 = vpack.c.b16 %v337, %v336
        %v353 = vpack.c.b16 %v339, %v338
        %v354 = vpack.c.b16 %v341, %v340
        %v355 = vpack.c.b16 %v343, %v342
        %v356 = vpack.c.b16 %v345, %v344
        %v357 = vpack.c.b16 %v347, %v346
        %v358 = vpack.c.b16 %v349, %v348
        %v359 = vpack.c.b16 %v351, %v350
        %368 = vmatpush.bf16.msra.mxu0 %v359
        %369 = vmatpush.bf16.msra.mxu0 %v358
        %370 = vmatpush.bf16.msra.mxu0 %v357
        %371 = vmatpush.bf16.msra.mxu0 %v356
        %372 = vmatpush.bf16.msra.mxu0 %v355
        %373 = vmatpush.bf16.msra.mxu0 %v354
        %374 = vmatpush.bf16.msra.mxu0 %v353
        %375 = vmatpush.bf16.msra.mxu0 %v352
        %376 = vmatmul.bf16.gmra.mxu0 %v296
        %v377 = vpop.f32.mrf.mxu0
        %v378 = vadd.f32 0.0, %v377
        %v379 = vpop.f32.mrf.mxu0
        %v380 = vadd.f32 0.0, %v379
        %381 = vmatmul.bf16.gmra.mxu0 %v297
        %v382 = vpop.f32.mrf.mxu0
        %v383 = vadd.f32 0.0, %v382
        %v384 = vpop.f32.mrf.mxu0
        %v385 = vadd.f32 0.0, %v384
        %386 = vmatmul.bf16.gmra.mxu0 %v298
        %v387 = vpop.f32.mrf.mxu0
        %v388 = vadd.f32 0.0, %v387
        %v389 = vpop.f32.mrf.mxu0
        %v390 = vadd.f32 0.0, %v389
        %391 = vmatmul.bf16.gmra.mxu0 %v299
        %v392 = vpop.f32.mrf.mxu0
        %v393 = vadd.f32 0.0, %v392
        %v394 = vpop.f32.mrf.mxu0
        %v395 = vadd.f32 0.0, %v394
        %396 = vmatmul.bf16.gmra.mxu0 %v300
        %v397 = vpop.f32.mrf.mxu0
        %v398 = vadd.f32 0.0, %v397
        %v399 = vpop.f32.mrf.mxu0
        %v400 = vadd.f32 0.0, %v399
        %401 = vmatmul.bf16.gmra.mxu0 %v301
        %v402 = vpop.f32.mrf.mxu0
        %v403 = vadd.f32 0.0, %v402
        %v404 = vpop.f32.mrf.mxu0
        %v405 = vadd.f32 0.0, %v404
        %406 = vmatmul.bf16.gmra.mxu0 %v302
        %v407 = vpop.f32.mrf.mxu0
        %v408 = vadd.f32 0.0, %v407
        %v409 = vpop.f32.mrf.mxu0
        %v410 = vadd.f32 0.0, %v409
        %411 = vmatmul.bf16.gmra.mxu0 %v303
        %v412 = vpop.f32.mrf.mxu0
        %v413 = vadd.f32 0.0, %v412
        %v414 = vpop.f32.mrf.mxu0
        %v415 = vadd.f32 0.0, %v414
        %416 = vmatmul.bf16.gmra.mxu0 %v304
        %v417 = vpop.f32.mrf.mxu0
        %v418 = vadd.f32 0.0, %v417
        %v419 = vpop.f32.mrf.mxu0
        %v420 = vadd.f32 0.0, %v419
        %421 = vmatmul.bf16.gmra.mxu0 %v305
        %v422 = vpop.f32.mrf.mxu0
        %v423 = vadd.f32 0.0, %v422
        %v424 = vpop.f32.mrf.mxu0
        %v425 = vadd.f32 0.0, %v424
        %426 = vmatmul.bf16.gmra.mxu0 %v306
        %v427 = vpop.f32.mrf.mxu0
        %v428 = vadd.f32 0.0, %v427
        %v429 = vpop.f32.mrf.mxu0
        %v430 = vadd.f32 0.0, %v429
        %431 = vmatmul.bf16.gmra.mxu0 %v307
        %v432 = vpop.f32.mrf.mxu0
        %v433 = vadd.f32 0.0, %v432
        %v434 = vpop.f32.mrf.mxu0
        %v435 = vadd.f32 0.0, %v434
        %436 = vdwg.mxu0
        %v437 = vmax.f32 %v378, %v393
        %v438 = vmax.f32 %v380, %v395
        %v439 = vmax.f32 %v383, %v398
        %v440 = vmax.f32 %v385, %v400
        %v441 = vmax.f32 %v388, %v403
        %v442 = vmax.f32 %v390, %v405
        %v443 = vmax.f32 %v437, %v408
        %v444 = vmax.f32 %v438, %v410
        %v445 = vmax.f32 %v439, %v413
        %v446 = vmax.f32 %v440, %v415
        %v447 = vmax.f32 %v441, %v418
        %v448 = vmax.f32 %v442, %v420
        %v449 = vmax.f32 %v443, %v423
        %v450 = vmax.f32 %v444, %v425
        %v451 = vmax.f32 %v445, %v428
        %v452 = vmax.f32 %v446, %v430
        %v453 = vmax.f32 %v447, %v433
        %v454 = vmax.f32 %v448, %v435
        %v455 = vmax.f32 %v449, 0.0
        %v456 = vmax.f32 %v450, 0.0
        %v457 = vmax.f32 %v451, 0.0
        %v458 = vmax.f32 %v452, 0.0
        %v459 = vmax.f32 %v453, 0.0
        %v460 = vmax.f32 %v454, 0.0
        %461 = vst [vmem:[%s205] sm:$0xff] %v455
        %462 = vst [vmem:[%s205 + $0x8] sm:$0xff] %v456
        %463 = vst [vmem:[%s205 + $0x10] sm:$0xff] %v457
        %464 = vst [vmem:[%s205 + $0x18] sm:$0xff] %v458
        %465 = vst [vmem:[%s205 + $0x20] sm:$0xff] %v459
        %466 = vst [vmem:[%s205 + $0x28] sm:$0xff] %v460
        %s467 = sand.u32 %s75, 1
        %s468 = scalar_lea.sflag [#allocation4], %s467
        %s469 = sand.u32 %s75, 1
        %s470 = smul.addr %s469, 48
        %s471 = scalar_lea.vmem [#allocation7], %s470
        // Predicated region
        $region37: #{tpu_custom_call.1} parent=27 // pred_check
          %p472 = pneg %p85
        $region38: #{tpu_custom_call.1} parent=27 // pred_check_branch
          %474 = sbr.rel (%p472) target = $region40
        $region39: #{tpu_custom_call.1} parent=27 // pred_region
          %s475 = smul.u32 6, %s20
          %477 = vsyncadd %s468, 0
          %s478 = smul.addr %s475, 8
          %s479 = scalar_lea.hbm %s2, %s478
          %s480 = sshll.u32 %s471, 4
          %s481 = int_to_ptr.vmem [resolvable:$true] %s480
          %s482 = sshll.u32 %s479, 4
          %s483 = int_to_ptr.hbm [resolvable:$true] %s482
          %488 = dma.vmem_to_hbm [thread:$0]  %s481, 768, %s483, %s468, 128, 128, 8
        $region40: #{tpu_custom_call.1} parent=27 // pred_fallthru
          _
      $region28: #{tpu_custom_call.1} parent=5 // pred_fallthru
        _
      %p489 = scmp.le.s32.totalorder 2, %s15
      // Predicated region
      $region41: #{tpu_custom_call.1} parent=5 // pred_check
        %p490 = pneg %p489
      $region42: #{tpu_custom_call.1} parent=5 // pred_check_branch
        %492 = sbr.rel (%p490) target = $region44
      $region43: #{tpu_custom_call.1} parent=5 // pred_region
        %s493 = ssub.s32 %s15, 2
        // Predicated region
        $region45: #{tpu_custom_call.1} parent=43 // pred_check
          %p494 = pneg %p91
        $region46: #{tpu_custom_call.1} parent=43 // pred_check_branch
          %496 = sbr.rel (%p494) target = $region48
        $region47: #{tpu_custom_call.1} parent=43 // pred_region
          %s497 = sand.u32 %s76, 1
          %s498 = scalar_lea.sflag [#allocation4], %s497
          %s499 = sand.u32 %s76, 1
          %s500 = smul.addr %s499, 48
          %s501 = scalar_lea.vmem [#allocation7], %s500
          %503 = dma.done %s498, 768
        $region48: #{tpu_custom_call.1} parent=43 // pred_fallthru
          _
      $region44: #{tpu_custom_call.1} parent=5 // pred_fallthru
        _
    $region6: #{tpu_custom_call.1} parent=1 // loop_footer
      %s19 = sadd.s32 1, %s15
    $region7: #{tpu_custom_call.1} parent=1 // loop_footer_branch
      %14 = sbr.rel target = $region3
    $region8: #{tpu_custom_call.1} parent=1 // loop_exit
      _
    %504 = vsyncpa [#allocation3], 1
    %s505 = scalar_lea.sflag [#allocation3], 1
    %506 = vsyncpa %s505, 1
    %507 = vsyncpa [#allocation6], 1
    %508 = vsyncpa [#allocation4], 1
    %s509 = scalar_lea.sflag [#allocation4], 1
    %510 = vsyncpa %s509, 1

</llo_original>
